<compile_context>
chip_gen: v7x
topology: tpu7x:2x2x1
jax: 0.10.0
libtpu: 0.0.40
codegen_flags: <defaults>
</compile_context>

<pallas_src>
import functools

import jax
import jax.numpy as jnp
from jax.experimental import pallas as pl
from jax.experimental.pallas import tpu as pltpu

SPLIT_SIZE = 512           # fixed by the module
HIDDEN = 2 * SPLIT_SIZE    # fc1 output width
LANE = 128


def _dueling_head_kernel(x_ref, w1_ref, b1_ref, w2_ref, b2_ref, q_ref, *,
                         n_actions):
    # fc1 + relu : (TB, in) @ (in, 1024) -> (TB, 1024), f32 accumulate on MXU
    h = jnp.dot(x_ref[...], w1_ref[...], preferred_element_type=jnp.float32)
    h = jnp.maximum(h + b1_ref[...], 0.0)

    # Fused, lane-padded head (block-diagonal weights built in the wrapper):
    #   cols [0, A)  = advantage (fed only by h[:, 512:])
    #   col  A       = value     (fed only by h[:, :512])
    #   cols  > A    = zero padding (keeps the output store lane-dense)
    va = jnp.dot(h, w2_ref[...], preferred_element_type=jnp.float32)
    va = va + b2_ref[...]

    lane = jax.lax.broadcasted_iota(jnp.int32, va.shape, 1)
    adv_sum = jnp.sum(jnp.where(lane < n_actions, va, 0.0), axis=1,
                      keepdims=True)
    value = jnp.sum(jnp.where(lane == n_actions, va, 0.0), axis=1,
                    keepdims=True)
    adv_mean = adv_sum * (1.0 / n_actions)

    # q = value + (adv - mean(adv)); only columns [0, n_actions) are meaningful
    # (padding columns are discarded in the wrapper).
    q_ref[...] = (value + va - adv_mean).astype(q_ref.dtype)


def dueling_head_forward(x, w1, b1, wv, bv, wa, ba, *, tile_b=256):
    batch, input_size = x.shape
    hidden = w1.shape[1]
    assert hidden == HIDDEN, "fc1 output width must be 2 * split_size = 1024"
    n_actions = wa.shape[1]
    head_pad = pl.cdiv(n_actions + 1, LANE) * LANE  # lane-dense head width

    f32 = jnp.float32
    # Fuse the two tiny head matmuls into one block-diagonal matmul and fold
    # the head biases in: one MXU op instead of two, lane-padded to 128.
    w2 = jnp.zeros((hidden, head_pad), f32)
    w2 = w2.at[SPLIT_SIZE:, :n_actions].set(wa.astype(f32))
    w2 = w2.at[:SPLIT_SIZE, n_actions:n_actions + 1].set(wv.astype(f32))
    b2 = jnp.zeros((1, head_pad), f32)
    b2 = b2.at[:, :n_actions].set(ba.reshape(1, n_actions).astype(f32))
    b2 = b2.at[:, n_actions:n_actions + 1].set(bv.reshape(1, 1).astype(f32))
    b1 = b1.reshape(1, hidden).astype(f32)

    # Batch tiling: sublane-aligned tile, batch zero-padded to a tile multiple.
    if batch < tile_b:
        tile_b = pl.cdiv(batch, 8) * 8
    b_pad = pl.cdiv(batch, tile_b) * tile_b
    x_p = x.astype(f32)
    if b_pad != batch:
        x_p = jnp.pad(x_p, ((0, b_pad - batch), (0, 0)))

    # TODO(synk): for very large input_size (>~2K) add a K grid axis with an
    # f32 accumulator in scratch to bound the resident w1/x tile sizes.
    grid = (b_pad // tile_b,)
    kernel = functools.partial(_dueling_head_kernel, n_actions=n_actions)
    q_pad = pl.pallas_call(
        kernel,
        out_shape=jax.ShapeDtypeStruct((b_pad, head_pad), jnp.float32),
        grid=grid,
        in_specs=[
            pl.BlockSpec((tile_b, input_size), lambda i: (i, 0)),  # x: pipelined
            pl.BlockSpec((input_size, hidden), lambda i: (0, 0)),  # w1: resident
            pl.BlockSpec((1, hidden), lambda i: (0, 0)),           # b1: resident
            pl.BlockSpec((hidden, head_pad), lambda i: (0, 0)),    # w2: resident
            pl.BlockSpec((1, head_pad), lambda i: (0, 0)),         # b2: resident
        ],
        out_specs=pl.BlockSpec((tile_b, head_pad), lambda i: (i, 0)),
        compiler_params=pltpu.CompilerParams(
            dimension_semantics=("parallel",)),
    )(x_p, w1.astype(f32), b1, w2, b2)
    return q_pad[:batch, :n_actions]


def reference_forward(x, w1, b1, wv, bv, wa, ba):
    h = jax.nn.relu(x @ w1 + b1)
    x1, x2 = h[:, :SPLIT_SIZE], h[:, SPLIT_SIZE:]
    value = x1 @ wv + bv
    adv = x2 @ wa + ba
    return value + (adv - jnp.mean(adv, axis=1, keepdims=True))


if __name__ == "__main__":
    key = jax.random.PRNGKey(0)
    input_size = 32
    n_actions = 4

    k_w1, k_b1, k_wv, k_bv, k_wa, k_ba, k_x1, k_x2 = jax.random.split(key, 8)

    # Deterministic synthetic parameters (nn.Linear weights_init is a no-op,
    # so the exact init scheme is not semantically important).
    w1 = jax.random.normal(k_w1, (input_size, HIDDEN), jnp.float32) * 0.05
    b1 = jax.random.normal(k_b1, (1, HIDDEN), jnp.float32) * 0.05
    wv = jax.random.normal(k_wv, (SPLIT_SIZE, 1), jnp.float32) * 0.05
    bv = jax.random.normal(k_bv, (1, 1), jnp.float32) * 0.05
    wa = jax.random.normal(k_wa, (SPLIT_SIZE, n_actions), jnp.float32) * 0.05
    ba = jax.random.normal(k_ba, (1, n_actions), jnp.float32) * 0.05

    # Small case (batch=2): single tile, batch padded up to the sublane multiple.
    x_small = jax.random.normal(k_x1, (2, input_size), jnp.float32)
    q_small = dueling_head_forward(x_small, w1, b1, wv, bv, wa, ba)
    jax.block_until_ready(q_small)
    q_small_ref = reference_forward(x_small, w1, b1, wv, bv, wa, ba)
    assert q_small.shape == (2, n_actions)
    assert jnp.allclose(q_small, q_small_ref, atol=1e-4, rtol=1e-4)

    # Multi-tile case: exercises the batch grid, pipelining and padding paths.
    x_big = jax.random.normal(k_x2, (40, input_size), jnp.float32)
    q_big = dueling_head_forward(x_big, w1, b1, wv, bv, wa, ba, tile_b=16)
    jax.block_until_ready(q_big)
    q_big_ref = reference_forward(x_big, w1, b1, wv, bv, wa, ba)
    assert q_big.shape == (40, n_actions)
    assert jnp.allclose(q_big, q_big_ref, atol=1e-4, rtol=1e-4)

    print("KERNEL_OK")
</pallas_src>

<mosaic_0001>
module attributes {stable_mosaic.version = 11 : i64} {
  func.func @_dueling_head_kernel(%arg0: i32, %arg1: memref<8x32xf32, #tpu.memory_space<vmem>>, %arg2: memref<32x1024xf32, #tpu.memory_space<vmem>>, %arg3: memref<1x1024xf32, #tpu.memory_space<vmem>>, %arg4: memref<1024x128xf32, #tpu.memory_space<vmem>>, %arg5: memref<1x128xf32, #tpu.memory_space<vmem>>, %arg6: memref<8x128xf32, #tpu.memory_space<vmem>>) attributes {dimension_semantics = [#tpu.dimension_semantics<parallel>], iteration_bounds = array<i64: 1>, scalar_prefetch = 0 : i64, scratch_operands = 0 : i64, tpu.core_type = #tpu.core_type<tc>, window_params = [{transform_indices = @transform_0, window_bounds = array<i64: 8, 32>}, {pipeline_mode = #tpu.pipeline_mode<synchronous>, transform_indices = @transform_1, window_bounds = array<i64: 32, 1024>}, {pipeline_mode = #tpu.pipeline_mode<synchronous>, transform_indices = @transform_2, window_bounds = array<i64: 1, 1024>}, {pipeline_mode = #tpu.pipeline_mode<synchronous>, transform_indices = @transform_3, window_bounds = array<i64: 1024, 128>}, {pipeline_mode = #tpu.pipeline_mode<synchronous>, transform_indices = @transform_4, window_bounds = array<i64: 1, 128>}, {transform_indices = @transform_5, window_bounds = array<i64: 8, 128>}]} {
    %c0 = arith.constant 0 : index
    %c0_0 = arith.constant 0 : index
    %0 = vector.load %arg1[%c0, %c0_0] : memref<8x32xf32, #tpu.memory_space<vmem>>, vector<8x32xf32>
    %c0_1 = arith.constant 0 : index
    %c0_2 = arith.constant 0 : index
    %1 = vector.load %arg2[%c0_1, %c0_2] : memref<32x1024xf32, #tpu.memory_space<vmem>>, vector<32x1024xf32>
    %cst = arith.constant dense<0.000000e+00> : vector<8x1024xf32>
    %2 = tpu.matmul %0, %1, %cst {dimension_numbers = #tpu.dot_dimension_numbers<[1], [0], [0], [1], [0, 0, 1, 1], [], []>} : vector<8x32xf32>, vector<32x1024xf32>, vector<8x1024xf32> -> vector<8x1024xf32>
    %c0_3 = arith.constant 0 : index
    %c0_4 = arith.constant 0 : index
    %3 = vector.load %arg3[%c0_3, %c0_4] : memref<1x1024xf32, #tpu.memory_space<vmem>>, vector<1x1024xf32>
    %4 = vector.broadcast %3 : vector<1x1024xf32> to vector<8x1024xf32>
    %5 = arith.addf %2, %4 : vector<8x1024xf32>
    %cst_5 = arith.constant 0.000000e+00 : f32
    %6 = vector.broadcast %cst_5 : f32 to vector<8x1024xf32>
    %7 = arith.maximumf %5, %6 : vector<8x1024xf32>
    %c0_6 = arith.constant 0 : index
    %c0_7 = arith.constant 0 : index
    %8 = vector.load %arg4[%c0_6, %c0_7] : memref<1024x128xf32, #tpu.memory_space<vmem>>, vector<1024x128xf32>
    %cst_8 = arith.constant dense<0.000000e+00> : vector<8x128xf32>
    %9 = tpu.matmul %7, %8, %cst_8 {dimension_numbers = #tpu.dot_dimension_numbers<[1], [0], [0], [1], [0, 0, 1, 1], [], []>} : vector<8x1024xf32>, vector<1024x128xf32>, vector<8x128xf32> -> vector<8x128xf32>
    %c0_9 = arith.constant 0 : index
    %c0_10 = arith.constant 0 : index
    %10 = vector.load %arg5[%c0_9, %c0_10] : memref<1x128xf32, #tpu.memory_space<vmem>>, vector<1x128xf32>
    %11 = vector.broadcast %10 : vector<1x128xf32> to vector<8x128xf32>
    %12 = arith.addf %9, %11 : vector<8x128xf32>
    %13 = tpu.iota {dimensions = array<i32: 1>} : vector<8x128xi32>
    %c4_i32 = arith.constant 4 : i32
    %14 = vector.broadcast %c4_i32 : i32 to vector<8x128xi32>
    %15 = arith.cmpi slt, %13, %14 : vector<8x128xi32>
    %cst_11 = arith.constant 0.000000e+00 : f32
    %16 = vector.broadcast %cst_11 : f32 to vector<8x128xf32>
    %17 = arith.select %15, %12, %16 : vector<8x128xi1>, vector<8x128xf32>
    %cst_12 = arith.constant dense<0.000000e+00> : vector<8xf32>
    %18 = vector.multi_reduction <add>, %17, %cst_12 [1] : vector<8x128xf32> to vector<8xf32>
    %19 = vector.shape_cast %18 : vector<8xf32> to vector<8x1xf32>
    %c4_i32_13 = arith.constant 4 : i32
    %20 = vector.broadcast %c4_i32_13 : i32 to vector<8x128xi32>
    %21 = arith.cmpi eq, %13, %20 : vector<8x128xi32>
    %cst_14 = arith.constant 0.000000e+00 : f32
    %22 = vector.broadcast %cst_14 : f32 to vector<8x128xf32>
    %23 = arith.select %21, %12, %22 : vector<8x128xi1>, vector<8x128xf32>
    %cst_15 = arith.constant dense<0.000000e+00> : vector<8xf32>
    %24 = vector.multi_reduction <add>, %23, %cst_15 [1] : vector<8x128xf32> to vector<8xf32>
    %25 = vector.shape_cast %24 : vector<8xf32> to vector<8x1xf32>
    %cst_16 = arith.constant 2.500000e-01 : f32
    %26 = vector.broadcast %cst_16 : f32 to vector<8x1xf32>
    %27 = arith.mulf %19, %26 : vector<8x1xf32>
    %28 = vector.broadcast %25 : vector<8x1xf32> to vector<8x128xf32>
    %29 = arith.addf %28, %12 : vector<8x128xf32>
    %30 = vector.broadcast %27 : vector<8x1xf32> to vector<8x128xf32>
    %31 = arith.subf %29, %30 : vector<8x128xf32>
    %c0_17 = arith.constant 0 : index
    %c0_18 = arith.constant 0 : index
    %32 = vector.load %arg6[%c0_17, %c0_18] : memref<8x128xf32, #tpu.memory_space<vmem>>, vector<8x128xf32>
    tpu.vector_store %arg6[%c0_17, %c0_18], %31 {strides = array<i32>} : memref<8x128xf32, #tpu.memory_space<vmem>>, vector<8x128xf32>,
    return
  }
  func.func @transform_0(%arg0: i32) -> (i32, i32) {
    %c0_i32 = arith.constant 0 : i32
    %c0_i32_0 = arith.constant 0 : i32
    return %arg0, %c0_i32 : i32, i32
  }
  func.func @transform_1(%arg0: i32) -> (i32, i32) {
    %c0_i32 = arith.constant 0 : i32
    %c0_i32_0 = arith.constant 0 : i32
    %c0_i32_1 = arith.constant 0 : i32
    return %c0_i32, %c0_i32_0 : i32, i32
  }
  func.func @transform_2(%arg0: i32) -> (i32, i32) {
    %c0_i32 = arith.constant 0 : i32
    %c0_i32_0 = arith.constant 0 : i32
    %c0_i32_1 = arith.constant 0 : i32
    return %c0_i32, %c0_i32_0 : i32, i32
  }
  func.func @transform_3(%arg0: i32) -> (i32, i32) {
    %c0_i32 = arith.constant 0 : i32
    %c0_i32_0 = arith.constant 0 : i32
    %c0_i32_1 = arith.constant 0 : i32
    return %c0_i32, %c0_i32_0 : i32, i32
  }
  func.func @transform_4(%arg0: i32) -> (i32, i32) {
    %c0_i32 = arith.constant 0 : i32
    %c0_i32_0 = arith.constant 0 : i32
    %c0_i32_1 = arith.constant 0 : i32
    return %c0_i32, %c0_i32_0 : i32, i32
  }
  func.func @transform_5(%arg0: i32) -> (i32, i32) {
    %c0_i32 = arith.constant 0 : i32
    %c0_i32_0 = arith.constant 0 : i32
    return %arg0, %c0_i32 : i32, i32
  }
}

</mosaic_0001>

<llo_original>
// kernel: tpu_custom_call.1
$region0: #{tpu_custom_call.1}
  #allocation0 [shape = 'u32[]', space=smem, size = 0x4, offset = 0x4, fixed_abs, tag = 'smem constant byte address 0x4 - core index']
  #allocation1 [shape = 'u32[144,128]{1,0:T(1,128)}', space=vmem, size = 0x12000, scoped, tag = 'internal scratch']
  %s0 = inlined_call_operand.hbm [shape: f32[8,32], index: 0, kind: input, shape index: {}]
  %s1 = inlined_call_operand.hbm [shape: f32[32,1024], index: 1, kind: input, shape index: {}]
  %s2 = inlined_call_operand.hbm [shape: f32[1,1024], index: 2, kind: input, shape index: {}]
  %s3 = inlined_call_operand.hbm [shape: f32[1024,128], index: 3, kind: input, shape index: {}]
  %s4 = inlined_call_operand.vmem [shape: f32[1,128], index: 4, kind: input, shape index: {}]
  %s5 = inlined_call_operand.hbm [shape: f32[8,128], index: 5, kind: output, shape index: {}]
  %s6 = sld [smem:[#allocation0]]
  $region46: #{tpu_custom_call.1} parent=0
    _
  %s8 = ssub.s32 1, %s6
  %s9 = scalar_select 0, %s8, %s6
  $region1: #{tpu_custom_call.1} parent=0
    #allocation2 [shape = 'u8[4096]{0}', space=vmem, size = 0x1000, scoped, tag = 'input window, operand 0, single buffered']
    #allocation3 [shape = 's32[1]{0}', space=sflag, size = 0x4, scoped, tag = 'scoped memory for tpu_custom_call.1']
    #allocation4 [shape = 's32[1]{0}', space=sflag, size = 0x4, scoped, tag = 'scoped memory for tpu_custom_call.1']
    #allocation5 [shape = 'u8[131072]{0}', space=vmem, size = 0x20000, scoped, tag = 'input window, operand 1, single buffered']
    #allocation6 [shape = 's32[1]{0}', space=sflag, size = 0x4, scoped, tag = 'scoped memory for tpu_custom_call.1']
    #allocation7 [shape = 'u8[4096]{0}', space=vmem, size = 0x1000, scoped, tag = 'input window, operand 2, single buffered']
    #allocation8 [shape = 'u8[524288]{0}', space=vmem, size = 0x80000, scoped, tag = 'input window, operand 3, single buffered']
    #allocation9 [shape = 's32[1]{0}', space=sflag, size = 0x4, scoped, tag = 'scoped memory for tpu_custom_call.1']
    #allocation10 [shape = 'u8[4096]{0}', space=vmem, size = 0x1000, scoped, tag = 'output window, operand 0, single buffered']
    %10 = vsyncpa [#allocation3], 0
    %11 = vsyncpa [#allocation6], 0
    %12 = vsyncpa [#allocation9], 0
    %13 = vsyncpa [#allocation4], 0
    // Predicated region
    $region2: #{tpu_custom_call.1} parent=1 // pred_check
      _
    $region3: #{tpu_custom_call.1} parent=1 // pred_check_branch
      %15 = sbr.rel (0) target = $region5
    $region4: #{tpu_custom_call.1} parent=1 // pred_region
      %s17 = ssub.s32 128, 128
      %18 = vsyncadd [#allocation3], %s17
      %s20 = sshll.u32 [#allocation2], 4
      %s21 = int_to_ptr.vmem [resolvable:$true] %s20
      %23 = dma.hbm_to_vmem [thread:$0]  %s0, 128, %s21, [#allocation3]
    $region5: #{tpu_custom_call.1} parent=1 // pred_fallthru
      _
    // Predicated region
    $region6: #{tpu_custom_call.1} parent=1 // pred_check
      _
    $region7: #{tpu_custom_call.1} parent=1 // pred_check_branch
      %25 = sbr.rel (0) target = $region9
    $region8: #{tpu_custom_call.1} parent=1 // pred_region
      %s27 = ssub.s32 4096, 4096
      %28 = vsyncadd [#allocation6], %s27
      %s29 = sshll.u32 [#allocation5], 4
      %s30 = int_to_ptr.vmem [resolvable:$true] %s29
      %35 = dma.hbm_to_vmem [thread:$0]  %s1, 4096, %s30, [#allocation6], 1024, 1024, 64
    $region9: #{tpu_custom_call.1} parent=1 // pred_fallthru
      _
    // Predicated region
    $region10: #{tpu_custom_call.1} parent=1 // pred_check
      _
    $region11: #{tpu_custom_call.1} parent=1 // pred_check_branch
      %37 = sbr.rel (0) target = $region13
    $region12: #{tpu_custom_call.1} parent=1 // pred_region
      %s39 = ssub.s32 128, 128
      %40 = vsyncadd [#allocation6], %s39
      %s42 = sshll.u32 [#allocation7], 4
      %s43 = int_to_ptr.vmem [resolvable:$true] %s42
      %45 = dma.hbm_to_vmem [thread:$0]  %s2, 128, %s43, [#allocation6]
    $region13: #{tpu_custom_call.1} parent=1 // pred_fallthru
      _
    // Predicated region
    $region14: #{tpu_custom_call.1} parent=1 // pred_check
      _
    $region15: #{tpu_custom_call.1} parent=1 // pred_check_branch
      %47 = sbr.rel (0) target = $region17
    $region16: #{tpu_custom_call.1} parent=1 // pred_region
      %s49 = ssub.s32 16384, 16384
      %50 = vsyncadd [#allocation9], %s49
      %s51 = sshll.u32 [#allocation8], 4
      %s52 = int_to_ptr.vmem [resolvable:$true] %s51
      %57 = dma.hbm_to_vmem [thread:$0]  %s3, 16384, %s52, [#allocation9], 128, 128, 8
    $region17: #{tpu_custom_call.1} parent=1 // pred_fallthru
      _
    // Predicated region
    $region18: #{tpu_custom_call.1} parent=1 // pred_check
      _
    $region19: #{tpu_custom_call.1} parent=1 // pred_check_branch
      %59 = sbr.rel (0) target = $region21
    $region20: #{tpu_custom_call.1} parent=1 // pred_region
      _
    $region21: #{tpu_custom_call.1} parent=1 // pred_fallthru
      _
    // Predicated region
    $region22: #{tpu_custom_call.1} parent=1 // pred_check
      _
    $region23: #{tpu_custom_call.1} parent=1 // pred_check_branch
      %61 = sbr.rel (0) target = $region25
    $region24: #{tpu_custom_call.1} parent=1 // pred_region
      %62 = dma.done [#allocation3], 128
    $region25: #{tpu_custom_call.1} parent=1 // pred_fallthru
      _
    // Predicated region
    $region26: #{tpu_custom_call.1} parent=1 // pred_check
      _
    $region27: #{tpu_custom_call.1} parent=1 // pred_check_branch
      %64 = sbr.rel (0) target = $region29
    $region28: #{tpu_custom_call.1} parent=1 // pred_region
      %65 = dma.done [#allocation6], 4096
    $region29: #{tpu_custom_call.1} parent=1 // pred_fallthru
      _
    // Predicated region
    $region30: #{tpu_custom_call.1} parent=1 // pred_check
      _
    $region31: #{tpu_custom_call.1} parent=1 // pred_check_branch
      %67 = sbr.rel (0) target = $region33
    $region32: #{tpu_custom_call.1} parent=1 // pred_region
      %68 = dma.done [#allocation6], 128
    $region33: #{tpu_custom_call.1} parent=1 // pred_fallthru
      _
    // Predicated region
    $region34: #{tpu_custom_call.1} parent=1 // pred_check
      _
    $region35: #{tpu_custom_call.1} parent=1 // pred_check_branch
      %70 = sbr.rel (0) target = $region37
    $region36: #{tpu_custom_call.1} parent=1 // pred_region
      %71 = dma.done [#allocation9], 16384
    $region37: #{tpu_custom_call.1} parent=1 // pred_fallthru
      _
    %v72 = vld [vmem:[#allocation2] sm:$0xff]
    %v73 = vld [vmem:[#allocation5] sm:$0xff]
    %v74 = vld [vmem:[#allocation5 + $0x8] sm:$0xff]
    %v75 = vld [vmem:[#allocation5 + $0x10] sm:$0xff]
    %v76 = vld [vmem:[#allocation5 + $0x18] sm:$0xff]
    %v77 = vld [vmem:[#allocation5 + $0x20] sm:$0xff]
    %v78 = vld [vmem:[#allocation5 + $0x28] sm:$0xff]
    %v79 = vld [vmem:[#allocation5 + $0x30] sm:$0xff]
    %v80 = vld [vmem:[#allocation5 + $0x38] sm:$0xff]
    %v81 = vld [vmem:[#allocation5 + $0x40] sm:$0xff]
    %v82 = vld [vmem:[#allocation5 + $0x48] sm:$0xff]
    %v83 = vld [vmem:[#allocation5 + $0x50] sm:$0xff]
    %v84 = vld [vmem:[#allocation5 + $0x58] sm:$0xff]
    %v85 = vld [vmem:[#allocation5 + $0x60] sm:$0xff]
    %v86 = vld [vmem:[#allocation5 + $0x68] sm:$0xff]
    %v87 = vld [vmem:[#allocation5 + $0x70] sm:$0xff]
    %v88 = vld [vmem:[#allocation5 + $0x78] sm:$0xff]
    %v89 = vld [vmem:[#allocation5 + $0x80] sm:$0xff]
    %v90 = vld [vmem:[#allocation5 + $0x88] sm:$0xff]
    %v91 = vld [vmem:[#allocation5 + $0x90] sm:$0xff]
    %v92 = vld [vmem:[#allocation5 + $0x98] sm:$0xff]
    %v93 = vld [vmem:[#allocation5 + $0xa0] sm:$0xff]
    %v94 = vld [vmem:[#allocation5 + $0xa8] sm:$0xff]
    %v95 = vld [vmem:[#allocation5 + $0xb0] sm:$0xff]
    %v96 = vld [vmem:[#allocation5 + $0xb8] sm:$0xff]
    %v97 = vld [vmem:[#allocation5 + $0xc0] sm:$0xff]
    %v98 = vld [vmem:[#allocation5 + $0xc8] sm:$0xff]
    %v99 = vld [vmem:[#allocation5 + $0xd0] sm:$0xff]
    %v100 = vld [vmem:[#allocation5 + $0xd8] sm:$0xff]
    %v101 = vld [vmem:[#allocation5 + $0xe0] sm:$0xff]
    %v102 = vld [vmem:[#allocation5 + $0xe8] sm:$0xff]
    %v103 = vld [vmem:[#allocation5 + $0xf0] sm:$0xff]
    %v104 = vld [vmem:[#allocation5 + $0xf8] sm:$0xff]
    %v105 = vld [vmem:[#allocation7] sm:$0xff]
    %v107 = vlaneseq
    %v108 = vshrl.u32 %v107, 7
    %v109 = vsub.s32 0, %v108
    %v110 = vrot.slane %v105, %v109
    %v111 = vlaneseq
    %v112 = vshrl.u32 %v111, 7
    %v113 = vsub.s32 1, %v112
    %v114 = vrot.slane %v105, %v113
    %v115 = vlaneseq
    %v116 = vshrl.u32 %v115, 7
    %v117 = vsub.s32 2, %v116
    %v118 = vrot.slane %v105, %v117
    %v119 = vlaneseq
    %v120 = vshrl.u32 %v119, 7
    %v121 = vsub.s32 3, %v120
    %v122 = vrot.slane %v105, %v121
    %v123 = vlaneseq
    %v124 = vshrl.u32 %v123, 7
    %v125 = vsub.s32 4, %v124
    %v126 = vrot.slane %v105, %v125
    %v127 = vlaneseq
    %v128 = vshrl.u32 %v127, 7
    %v129 = vsub.s32 5, %v128
    %v130 = vrot.slane %v105, %v129
    %v131 = vlaneseq
    %v132 = vshrl.u32 %v131, 7
    %v133 = vsub.s32 6, %v132
    %v134 = vrot.slane %v105, %v133
    %v135 = vlaneseq
    %v136 = vshrl.u32 %v135, 7
    %v137 = vsub.s32 7, %v136
    %v138 = vrot.slane %v105, %v137
    %vm147 = vcmask 261120
    %v149 = vsel %vm147, %v72, 0
    %151 = vmatprep.subr.mxu0 %v74
    %152 = vmatpush1.msra.mxu0 %v73
    %153 = vmatprep.subr.mxu0 %v82
    %154 = vmatpush1.msra.mxu0 %v81
    %155 = vmatprep.subr.mxu0 %v90
    %156 = vmatpush1.msra.mxu0 %v89
    %157 = vmatprep.subr.mxu0 %v98
    %158 = vmatpush1.msra.mxu0 %v97
    %159 = vmatprep.subr.mxu0 0.0
    %160 = vmatpush1.msra.mxu0 0.0
    %161 = vmatprep.subr.mxu0 0.0
    %162 = vmatpush1.msra.mxu0 0.0
    %163 = vmatprep.subr.mxu0 0.0
    %164 = vmatpush1.msra.mxu0 0.0
    %165 = vmatprep.subr.mxu0 0.0
    %166 = vmatpush1.msra.mxu0 0.0
    %167 = vmatprep.subr.mxu0 0.0
    %168 = vmatpush1.msra.mxu0 0.0
    %169 = vmatprep.subr.mxu0 0.0
    %170 = vmatpush1.msra.mxu0 0.0
    %171 = vmatprep.subr.mxu0 0.0
    %172 = vmatpush1.msra.mxu0 0.0
    %173 = vmatprep.subr.mxu0 0.0
    %174 = vmatpush1.msra.mxu0 0.0
    %175 = vmatprep.subr.mxu0 0.0
    %176 = vmatpush1.msra.mxu0 0.0
    %177 = vmatprep.subr.mxu0 0.0
    %178 = vmatpush1.msra.mxu0 0.0
    %179 = vmatprep.subr.mxu0 0.0
    %180 = vmatpush1.msra.mxu0 0.0
    %181 = vmatprep.subr.mxu0 0.0
    %182 = vmatpush1.msra.mxu0 0.0
    %183 = vmatprep.subr.mxu0 0.0
    %184 = vmatpush1.msra.mxu0 0.0
    %185 = vmatprep.subr.mxu0 0.0
    %186 = vmatpush1.msra.mxu0 0.0
    %187 = vmatprep.subr.mxu0 0.0
    %188 = vmatpush1.msra.mxu0 0.0
    %189 = vmatprep.subr.mxu0 0.0
    %190 = vmatpush1.msra.mxu0 0.0
    %191 = vmatprep.subr.mxu0 0.0
    %192 = vmatpush1.msra.mxu0 0.0
    %193 = vmatprep.subr.mxu0 0.0
    %194 = vmatpush1.msra.mxu0 0.0
    %195 = vmatprep.subr.mxu0 0.0
    %196 = vmatpush1.msra.mxu0 0.0
    %197 = vmatprep.subr.mxu0 0.0
    %198 = vmatpush1.msra.mxu0 0.0
    %199 = vmatprep.subr.mxu0 0.0
    %200 = vmatpush1.msra.mxu0 0.0
    %201 = vmatprep.subr.mxu0 0.0
    %202 = vmatpush1.msra.mxu0 0.0
    %203 = vmatprep.subr.mxu0 0.0
    %204 = vmatpush1.msra.mxu0 0.0
    %205 = vmatprep.subr.mxu0 0.0
    %206 = vmatpush1.msra.mxu0 0.0
    %207 = vmatprep.subr.mxu0 0.0
    %208 = vmatpush1.msra.mxu0 0.0
    %209 = vmatprep.subr.mxu0 0.0
    %210 = vmatpush1.msra.mxu0 0.0
    %211 = vmatprep.subr.mxu0 0.0
    %212 = vmatpush1.msra.mxu0 0.0
    %213 = vmatprep.subr.mxu0 0.0
    %214 = vmatpush1.msra.mxu0 0.0
    %215 = vmatprep.mubr.f32.mxu0 0.0
    %216 = vmatmul.mubr.f32.gmra.mrb[0].mxu0 %v149
    %v217 = vpop.f32.mrb[0].mxu0
    %v218 = vadd.f32 %v110, %v217
    %v219 = vpop.f32.mrb[0].mxu0
    %v220 = vadd.f32 %v114, %v219
    %221 = vdwg.mxu0
    %222 = vmatprep.subr.mxu0 %v76
    %223 = vmatpush1.msra.mxu0 %v75
    %224 = vmatprep.subr.mxu0 %v84
    %225 = vmatpush1.msra.mxu0 %v83
    %226 = vmatprep.subr.mxu0 %v92
    %227 = vmatpush1.msra.mxu0 %v91
    %228 = vmatprep.subr.mxu0 %v100
    %229 = vmatpush1.msra.mxu0 %v99
    %230 = vmatprep.subr.mxu0 0.0
    %231 = vmatpush1.msra.mxu0 0.0
    %232 = vmatprep.subr.mxu0 0.0
    %233 = vmatpush1.msra.mxu0 0.0
    %234 = vmatprep.subr.mxu0 0.0
    %235 = vmatpush1.msra.mxu0 0.0
    %236 = vmatprep.subr.mxu0 0.0
    %237 = vmatpush1.msra.mxu0 0.0
    %238 = vmatprep.subr.mxu0 0.0
    %239 = vmatpush1.msra.mxu0 0.0
    %240 = vmatprep.subr.mxu0 0.0
    %241 = vmatpush1.msra.mxu0 0.0
    %242 = vmatprep.subr.mxu0 0.0
    %243 = vmatpush1.msra.mxu0 0.0
    %244 = vmatprep.subr.mxu0 0.0
    %245 = vmatpush1.msra.mxu0 0.0
    %246 = vmatprep.subr.mxu0 0.0
    %247 = vmatpush1.msra.mxu0 0.0
    %248 = vmatprep.subr.mxu0 0.0
    %249 = vmatpush1.msra.mxu0 0.0
    %250 = vmatprep.subr.mxu0 0.0
    %251 = vmatpush1.msra.mxu0 0.0
    %252 = vmatprep.subr.mxu0 0.0
    %253 = vmatpush1.msra.mxu0 0.0
    %254 = vmatprep.subr.mxu0 0.0
    %255 = vmatpush1.msra.mxu0 0.0
    %256 = vmatprep.subr.mxu0 0.0
    %257 = vmatpush1.msra.mxu0 0.0
    %258 = vmatprep.subr.mxu0 0.0
    %259 = vmatpush1.msra.mxu0 0.0
    %260 = vmatprep.subr.mxu0 0.0
    %261 = vmatpush1.msra.mxu0 0.0
    %262 = vmatprep.subr.mxu0 0.0
    %263 = vmatpush1.msra.mxu0 0.0
    %264 = vmatprep.subr.mxu0 0.0
    %265 = vmatpush1.msra.mxu0 0.0
    %266 = vmatprep.subr.mxu0 0.0
    %267 = vmatpush1.msra.mxu0 0.0
    %268 = vmatprep.subr.mxu0 0.0
    %269 = vmatpush1.msra.mxu0 0.0
    %270 = vmatprep.subr.mxu0 0.0
    %271 = vmatpush1.msra.mxu0 0.0
    %272 = vmatprep.subr.mxu0 0.0
    %273 = vmatpush1.msra.mxu0 0.0
    %274 = vmatprep.subr.mxu0 0.0
    %275 = vmatpush1.msra.mxu0 0.0
    %276 = vmatprep.subr.mxu0 0.0
    %277 = vmatpush1.msra.mxu0 0.0
    %278 = vmatprep.subr.mxu0 0.0
    %279 = vmatpush1.msra.mxu0 0.0
    %280 = vmatprep.subr.mxu0 0.0
    %281 = vmatpush1.msra.mxu0 0.0
    %282 = vmatprep.subr.mxu0 0.0
    %283 = vmatpush1.msra.mxu0 0.0
    %284 = vmatprep.subr.mxu0 0.0
    %285 = vmatpush1.msra.mxu0 0.0
    %286 = vmatprep.mubr.f32.mxu0 0.0
    %287 = vmatmul.mubr.f32.gmra.mrb[0].mxu0 %v149
    %v288 = vpop.f32.mrb[0].mxu0
    %v289 = vadd.f32 %v118, %v288
    %v290 = vpop.f32.mrb[0].mxu0
    %v291 = vadd.f32 %v122, %v290
    %292 = vdwg.mxu0
    %293 = vmatprep.subr.mxu0 %v78
    %294 = vmatpush1.msra.mxu0 %v77
    %295 = vmatprep.subr.mxu0 %v86
    %296 = vmatpush1.msra.mxu0 %v85
    %297 = vmatprep.subr.mxu0 %v94
    %298 = vmatpush1.msra.mxu0 %v93
    %299 = vmatprep.subr.mxu0 %v102
    %300 = vmatpush1.msra.mxu0 %v101
    %301 = vmatprep.subr.mxu0 0.0
    %302 = vmatpush1.msra.mxu0 0.0
    %303 = vmatprep.subr.mxu0 0.0
    %304 = vmatpush1.msra.mxu0 0.0
    %305 = vmatprep.subr.mxu0 0.0
    %306 = vmatpush1.msra.mxu0 0.0
    %307 = vmatprep.subr.mxu0 0.0
    %308 = vmatpush1.msra.mxu0 0.0
    %309 = vmatprep.subr.mxu0 0.0
    %310 = vmatpush1.msra.mxu0 0.0
    %311 = vmatprep.subr.mxu0 0.0
    %312 = vmatpush1.msra.mxu0 0.0
    %313 = vmatprep.subr.mxu0 0.0
    %314 = vmatpush1.msra.mxu0 0.0
    %315 = vmatprep.subr.mxu0 0.0
    %316 = vmatpush1.msra.mxu0 0.0
    %317 = vmatprep.subr.mxu0 0.0
    %318 = vmatpush1.msra.mxu0 0.0
    %319 = vmatprep.subr.mxu0 0.0
    %320 = vmatpush1.msra.mxu0 0.0
    %321 = vmatprep.subr.mxu0 0.0
    %322 = vmatpush1.msra.mxu0 0.0
    %323 = vmatprep.subr.mxu0 0.0
    %324 = vmatpush1.msra.mxu0 0.0
    %325 = vmatprep.subr.mxu0 0.0
    %326 = vmatpush1.msra.mxu0 0.0
    %327 = vmatprep.subr.mxu0 0.0
    %328 = vmatpush1.msra.mxu0 0.0
    %329 = vmatprep.subr.mxu0 0.0
    %330 = vmatpush1.msra.mxu0 0.0
    %331 = vmatprep.subr.mxu0 0.0
    %332 = vmatpush1.msra.mxu0 0.0
    %333 = vmatprep.subr.mxu0 0.0
    %334 = vmatpush1.msra.mxu0 0.0
    %335 = vmatprep.subr.mxu0 0.0
    %336 = vmatpush1.msra.mxu0 0.0
    %337 = vmatprep.subr.mxu0 0.0
    %338 = vmatpush1.msra.mxu0 0.0
    %339 = vmatprep.subr.mxu0 0.0
    %340 = vmatpush1.msra.mxu0 0.0
    %341 = vmatprep.subr.mxu0 0.0
    %342 = vmatpush1.msra.mxu0 0.0
    %343 = vmatprep.subr.mxu0 0.0
    %344 = vmatpush1.msra.mxu0 0.0
    %345 = vmatprep.subr.mxu0 0.0
    %346 = vmatpush1.msra.mxu0 0.0
    %347 = vmatprep.subr.mxu0 0.0
    %348 = vmatpush1.msra.mxu0 0.0
    %349 = vmatprep.subr.mxu0 0.0
    %350 = vmatpush1.msra.mxu0 0.0
    %351 = vmatprep.subr.mxu0 0.0
    %352 = vmatpush1.msra.mxu0 0.0
    %353 = vmatprep.subr.mxu0 0.0
    %354 = vmatpush1.msra.mxu0 0.0
    %355 = vmatprep.subr.mxu0 0.0
    %356 = vmatpush1.msra.mxu0 0.0
    %357 = vmatprep.mubr.f32.mxu0 0.0
    %358 = vmatmul.mubr.f32.gmra.mrb[0].mxu0 %v149
    %v359 = vpop.f32.mrb[0].mxu0
    %v360 = vadd.f32 %v126, %v359
    %v361 = vpop.f32.mrb[0].mxu0
    %v362 = vadd.f32 %v130, %v361
    %363 = vdwg.mxu0
    %364 = vmatprep.subr.mxu0 %v80
    %365 = vmatpush1.msra.mxu0 %v79
    %366 = vmatprep.subr.mxu0 %v88
    %367 = vmatpush1.msra.mxu0 %v87
    %368 = vmatprep.subr.mxu0 %v96
    %369 = vmatpush1.msra.mxu0 %v95
    %370 = vmatprep.subr.mxu0 %v104
    %371 = vmatpush1.msra.mxu0 %v103
    %372 = vmatprep.subr.mxu0 0.0
    %373 = vmatpush1.msra.mxu0 0.0
    %374 = vmatprep.subr.mxu0 0.0
    %375 = vmatpush1.msra.mxu0 0.0
    %376 = vmatprep.subr.mxu0 0.0
    %377 = vmatpush1.msra.mxu0 0.0
    %378 = vmatprep.subr.mxu0 0.0
    %379 = vmatpush1.msra.mxu0 0.0
    %380 = vmatprep.subr.mxu0 0.0
    %381 = vmatpush1.msra.mxu0 0.0
    %382 = vmatprep.subr.mxu0 0.0
    %383 = vmatpush1.msra.mxu0 0.0
    %384 = vmatprep.subr.mxu0 0.0
    %385 = vmatpush1.msra.mxu0 0.0
    %386 = vmatprep.subr.mxu0 0.0
    %387 = vmatpush1.msra.mxu0 0.0
    %388 = vmatprep.subr.mxu0 0.0
    %389 = vmatpush1.msra.mxu0 0.0
    %390 = vmatprep.subr.mxu0 0.0
    %391 = vmatpush1.msra.mxu0 0.0
    %392 = vmatprep.subr.mxu0 0.0
    %393 = vmatpush1.msra.mxu0 0.0
    %394 = vmatprep.subr.mxu0 0.0
    %395 = vmatpush1.msra.mxu0 0.0
    %396 = vmatprep.subr.mxu0 0.0
    %397 = vmatpush1.msra.mxu0 0.0
    %398 = vmatprep.subr.mxu0 0.0
    %399 = vmatpush1.msra.mxu0 0.0
    %400 = vmatprep.subr.mxu0 0.0
    %401 = vmatpush1.msra.mxu0 0.0
    %402 = vmatprep.subr.mxu0 0.0
    %403 = vmatpush1.msra.mxu0 0.0
    %404 = vmatprep.subr.mxu0 0.0
    %405 = vmatpush1.msra.mxu0 0.0
    %406 = vmatprep.subr.mxu0 0.0
    %407 = vmatpush1.msra.mxu0 0.0
    %408 = vmatprep.subr.mxu0 0.0
    %409 = vmatpush1.msra.mxu0 0.0
    %410 = vmatprep.subr.mxu0 0.0
    %411 = vmatpush1.msra.mxu0 0.0
    %412 = vmatprep.subr.mxu0 0.0
    %413 = vmatpush1.msra.mxu0 0.0
    %414 = vmatprep.subr.mxu0 0.0
    %415 = vmatpush1.msra.mxu0 0.0
    %416 = vmatprep.subr.mxu0 0.0
    %417 = vmatpush1.msra.mxu0 0.0
    %418 = vmatprep.subr.mxu0 0.0
    %419 = vmatpush1.msra.mxu0 0.0
    %420 = vmatprep.subr.mxu0 0.0
    %421 = vmatpush1.msra.mxu0 0.0
    %422 = vmatprep.subr.mxu0 0.0
    %423 = vmatpush1.msra.mxu0 0.0
    %424 = vmatprep.subr.mxu0 0.0
    %425 = vmatpush1.msra.mxu0 0.0
    %426 = vmatprep.subr.mxu0 0.0
    %427 = vmatpush1.msra.mxu0 0.0
    %428 = vmatprep.mubr.f32.mxu0 0.0
    %429 = vmatmul.mubr.f32.gmra.mrb[0].mxu0 %v149
    %v430 = vpop.f32.mrb[0].mxu0
    %v431 = vadd.f32 %v134, %v430
    %v432 = vpop.f32.mrb[0].mxu0
    %v433 = vadd.f32 %v138, %v432
    %434 = vdwg.mxu0
    %v435 = vmax.f32 %v218, 0.0
    %v436 = vmax.f32 %v220, 0.0
    %v437 = vmax.f32 %v289, 0.0
    %v438 = vmax.f32 %v291, 0.0
    %v439 = vmax.f32 %v360, 0.0
    %v440 = vmax.f32 %v362, 0.0
    %v441 = vmax.f32 %v431, 0.0
    %v442 = vmax.f32 %v433, 0.0
    %v443 = vld [vmem:[#allocation8] sm:$0xff]
    %v444 = vld [vmem:[#allocation8 + $0x8] sm:$0xff]
    %v445 = vld [vmem:[#allocation8 + $0x10] sm:$0xff]
    %v446 = vld [vmem:[#allocation8 + $0x18] sm:$0xff]
    %v447 = vld [vmem:[#allocation8 + $0x20] sm:$0xff]
    %v448 = vld [vmem:[#allocation8 + $0x28] sm:$0xff]
    %v449 = vld [vmem:[#allocation8 + $0x30] sm:$0xff]
    %v450 = vld [vmem:[#allocation8 + $0x38] sm:$0xff]
    %v451 = vld [vmem:[#allocation8 + $0x40] sm:$0xff]
    %v452 = vld [vmem:[#allocation8 + $0x48] sm:$0xff]
    %v453 = vld [vmem:[#allocation8 + $0x50] sm:$0xff]
    %v454 = vld [vmem:[#allocation8 + $0x58] sm:$0xff]
    %v455 = vld [vmem:[#allocation8 + $0x60] sm:$0xff]
    %v456 = vld [vmem:[#allocation8 + $0x68] sm:$0xff]
    %v457 = vld [vmem:[#allocation8 + $0x70] sm:$0xff]
    %v458 = vld [vmem:[#allocation8 + $0x78] sm:$0xff]
    %v459 = vld [vmem:[#allocation8 + $0x80] sm:$0xff]
    %v460 = vld [vmem:[#allocation8 + $0x88] sm:$0xff]
    %v461 = vld [vmem:[#allocation8 + $0x90] sm:$0xff]
    %v462 = vld [vmem:[#allocation8 + $0x98] sm:$0xff]
    %v463 = vld [vmem:[#allocation8 + $0xa0] sm:$0xff]
    %v464 = vld [vmem:[#allocation8 + $0xa8] sm:$0xff]
    %v465 = vld [vmem:[#allocation8 + $0xb0] sm:$0xff]
    %v466 = vld [vmem:[#allocation8 + $0xb8] sm:$0xff]
    %v467 = vld [vmem:[#allocation8 + $0xc0] sm:$0xff]
    %v468 = vld [vmem:[#allocation8 + $0xc8] sm:$0xff]
    %v469 = vld [vmem:[#allocation8 + $0xd0] sm:$0xff]
    %v470 = vld [vmem:[#allocation8 + $0xd8] sm:$0xff]
    %v471 = vld [vmem:[#allocation8 + $0xe0] sm:$0xff]
    %v472 = vld [vmem:[#allocation8 + $0xe8] sm:$0xff]
    %v473 = vld [vmem:[#allocation8 + $0xf0] sm:$0xff]
    %v474 = vld [vmem:[#allocation8 + $0xf8] sm:$0xff]
    %v475 = vld [vmem:[#allocation8 + $0x100] sm:$0xff]
    %v476 = vld [vmem:[#allocation8 + $0x108] sm:$0xff]
    %v477 = vld [vmem:[#allocation8 + $0x110] sm:$0xff]
    %v478 = vld [vmem:[#allocation8 + $0x118] sm:$0xff]
    %v479 = vld [vmem:[#allocation8 + $0x120] sm:$0xff]
    %v480 = vld [vmem:[#allocation8 + $0x128] sm:$0xff]
    %v481 = vld [vmem:[#allocation8 + $0x130] sm:$0xff]
    %v482 = vld [vmem:[#allocation8 + $0x138] sm:$0xff]
    %v483 = vld [vmem:[#allocation8 + $0x140] sm:$0xff]
    %v484 = vld [vmem:[#allocation8 + $0x148] sm:$0xff]
    %v485 = vld [vmem:[#allocation8 + $0x150] sm:$0xff]
    %v486 = vld [vmem:[#allocation8 + $0x158] sm:$0xff]
    %v487 = vld [vmem:[#allocation8 + $0x160] sm:$0xff]
    %v488 = vld [vmem:[#allocation8 + $0x168] sm:$0xff]
    %v489 = vld [vmem:[#allocation8 + $0x170] sm:$0xff]
    %v490 = vld [vmem:[#allocation8 + $0x178] sm:$0xff]
    %v491 = vld [vmem:[#allocation8 + $0x180] sm:$0xff]
    %v492 = vld [vmem:[#allocation8 + $0x188] sm:$0xff]
    %v493 = vld [vmem:[#allocation8 + $0x190] sm:$0xff]
    %v494 = vld [vmem:[#allocation8 + $0x198] sm:$0xff]
    %v495 = vld [vmem:[#allocation8 + $0x1a0] sm:$0xff]
    %v496 = vld [vmem:[#allocation8 + $0x1a8] sm:$0xff]
    %v497 = vld [vmem:[#allocation8 + $0x1b0] sm:$0xff]
    %v498 = vld [vmem:[#allocation8 + $0x1b8] sm:$0xff]
    %v499 = vld [vmem:[#allocation8 + $0x1c0] sm:$0xff]
    %v500 = vld [vmem:[#allocation8 + $0x1c8] sm:$0xff]
    %v501 = vld [vmem:[#allocation8 + $0x1d0] sm:$0xff]
    %v502 = vld [vmem:[#allocation8 + $0x1d8] sm:$0xff]
    %v503 = vld [vmem:[#allocation8 + $0x1e0] sm:$0xff]
    %v504 = vld [vmem:[#allocation8 + $0x1e8] sm:$0xff]
    %v505 = vld [vmem:[#allocation8 + $0x1f0] sm:$0xff]
    %v506 = vld [vmem:[#allocation8 + $0x1f8] sm:$0xff]
    %v507 = vld [vmem:[#allocation8 + $0x200] sm:$0xff]
    %v508 = vld [vmem:[#allocation8 + $0x208] sm:$0xff]
    %v509 = vld [vmem:[#allocation8 + $0x210] sm:$0xff]
    %v510 = vld [vmem:[#allocation8 + $0x218] sm:$0xff]
    %v511 = vld [vmem:[#allocation8 + $0x220] sm:$0xff]
    %v512 = vld [vmem:[#allocation8 + $0x228] sm:$0xff]
    %v513 = vld [vmem:[#allocation8 + $0x230] sm:$0xff]
    %v514 = vld [vmem:[#allocation8 + $0x238] sm:$0xff]
    %v515 = vld [vmem:[#allocation8 + $0x240] sm:$0xff]
    %v516 = vld [vmem:[#allocation8 + $0x248] sm:$0xff]
    %v517 = vld [vmem:[#allocation8 + $0x250] sm:$0xff]
    %v518 = vld [vmem:[#allocation8 + $0x258] sm:$0xff]
    %v519 = vld [vmem:[#allocation8 + $0x260] sm:$0xff]
    %v520 = vld [vmem:[#allocation8 + $0x268] sm:$0xff]
    %v521 = vld [vmem:[#allocation8 + $0x270] sm:$0xff]
    %v522 = vld [vmem:[#allocation8 + $0x278] sm:$0xff]
    %v523 = vld [vmem:[#allocation8 + $0x280] sm:$0xff]
    %v524 = vld [vmem:[#allocation8 + $0x288] sm:$0xff]
    %v525 = vld [vmem:[#allocation8 + $0x290] sm:$0xff]
    %v526 = vld [vmem:[#allocation8 + $0x298] sm:$0xff]
    %v527 = vld [vmem:[#allocation8 + $0x2a0] sm:$0xff]
    %v528 = vld [vmem:[#allocation8 + $0x2a8] sm:$0xff]
    %v529 = vld [vmem:[#allocation8 + $0x2b0] sm:$0xff]
    %v530 = vld [vmem:[#allocation8 + $0x2b8] sm:$0xff]
    %v531 = vld [vmem:[#allocation8 + $0x2c0] sm:$0xff]
    %v532 = vld [vmem:[#allocation8 + $0x2c8] sm:$0xff]
    %v533 = vld [vmem:[#allocation8 + $0x2d0] sm:$0xff]
    %v534 = vld [vmem:[#allocation8 + $0x2d8] sm:$0xff]
    %v535 = vld [vmem:[#allocation8 + $0x2e0] sm:$0xff]
    %v536 = vld [vmem:[#allocation8 + $0x2e8] sm:$0xff]
    %v537 = vld [vmem:[#allocation8 + $0x2f0] sm:$0xff]
    %v538 = vld [vmem:[#allocation8 + $0x2f8] sm:$0xff]
    %v539 = vld [vmem:[#allocation8 + $0x300] sm:$0xff]
    %v540 = vld [vmem:[#allocation8 + $0x308] sm:$0xff]
    %v541 = vld [vmem:[#allocation8 + $0x310] sm:$0xff]
    %v542 = vld [vmem:[#allocation8 + $0x318] sm:$0xff]
    %v543 = vld [vmem:[#allocation8 + $0x320] sm:$0xff]
    %v544 = vld [vmem:[#allocation8 + $0x328] sm:$0xff]
    %v545 = vld [vmem:[#allocation8 + $0x330] sm:$0xff]
    %v546 = vld [vmem:[#allocation8 + $0x338] sm:$0xff]
    %v547 = vld [vmem:[#allocation8 + $0x340] sm:$0xff]
    %v548 = vld [vmem:[#allocation8 + $0x348] sm:$0xff]
    %v549 = vld [vmem:[#allocation8 + $0x350] sm:$0xff]
    %v550 = vld [vmem:[#allocation8 + $0x358] sm:$0xff]
    %v551 = vld [vmem:[#allocation8 + $0x360] sm:$0xff]
    %v552 = vld [vmem:[#allocation8 + $0x368] sm:$0xff]
    %v553 = vld [vmem:[#allocation8 + $0x370] sm:$0xff]
    %v554 = vld [vmem:[#allocation8 + $0x378] sm:$0xff]
    %v555 = vld [vmem:[#allocation8 + $0x380] sm:$0xff]
    %v556 = vld [vmem:[#allocation8 + $0x388] sm:$0xff]
    %v557 = vld [vmem:[#allocation8 + $0x390] sm:$0xff]
    %v558 = vld [vmem:[#allocation8 + $0x398] sm:$0xff]
    %v559 = vld [vmem:[#allocation8 + $0x3a0] sm:$0xff]
    %v560 = vld [vmem:[#allocation8 + $0x3a8] sm:$0xff]
    %v561 = vld [vmem:[#allocation8 + $0x3b0] sm:$0xff]
    %v562 = vld [vmem:[#allocation8 + $0x3b8] sm:$0xff]
    %v563 = vld [vmem:[#allocation8 + $0x3c0] sm:$0xff]
    %v564 = vld [vmem:[#allocation8 + $0x3c8] sm:$0xff]
    %v565 = vld [vmem:[#allocation8 + $0x3d0] sm:$0xff]
    %v566 = vld [vmem:[#allocation8 + $0x3d8] sm:$0xff]
    %v567 = vld [vmem:[#allocation8 + $0x3e0] sm:$0xff]
    %v568 = vld [vmem:[#allocation8 + $0x3e8] sm:$0xff]
    %v569 = vld [vmem:[#allocation8 + $0x3f0] sm:$0xff]
    %v570 = vld [vmem:[#allocation8 + $0x3f8] sm:$0xff]
    %v571 = vld [vmem:[%s4] sm:$0x1]
    %v573 = vlaneseq
    %v574 = vshrl.u32 %v573, 7
    %v575 = vsub.s32 0, %v574
    %v576 = vrot.slane %v571, %v575
    %578 = vmatprep.subr.mxu0 0.0
    %579 = vmatpush1.msra.mxu0 %v443
    %580 = vmatprep.subr.mxu0 0.0
    %581 = vmatpush1.msra.mxu0 %v444
    %582 = vmatprep.subr.mxu0 0.0
    %583 = vmatpush1.msra.mxu0 %v445
    %584 = vmatprep.subr.mxu0 0.0
    %585 = vmatpush1.msra.mxu0 %v446
    %586 = vmatprep.subr.mxu0 0.0
    %587 = vmatpush1.msra.mxu0 %v447
    %588 = vmatprep.subr.mxu0 0.0
    %589 = vmatpush1.msra.mxu0 %v448
    %590 = vmatprep.subr.mxu0 0.0
    %591 = vmatpush1.msra.mxu0 %v449
    %592 = vmatprep.subr.mxu0 0.0
    %593 = vmatpush1.msra.mxu0 %v450
    %594 = vmatprep.subr.mxu0 0.0
    %595 = vmatpush1.msra.mxu0 %v451
    %596 = vmatprep.subr.mxu0 0.0
    %597 = vmatpush1.msra.mxu0 %v452
    %598 = vmatprep.subr.mxu0 0.0
    %599 = vmatpush1.msra.mxu0 %v453
    %600 = vmatprep.subr.mxu0 0.0
    %601 = vmatpush1.msra.mxu0 %v454
    %602 = vmatprep.subr.mxu0 0.0
    %603 = vmatpush1.msra.mxu0 %v455
    %604 = vmatprep.subr.mxu0 0.0
    %605 = vmatpush1.msra.mxu0 %v456
    %606 = vmatprep.subr.mxu0 0.0
    %607 = vmatpush1.msra.mxu0 %v457
    %608 = vmatprep.subr.mxu0 0.0
    %609 = vmatpush1.msra.mxu0 %v458
    %610 = vmatprep.subr.mxu0 0.0
    %611 = vmatpush1.msra.mxu0 %v459
    %612 = vmatprep.subr.mxu0 0.0
    %613 = vmatpush1.msra.mxu0 %v460
    %614 = vmatprep.subr.mxu0 0.0
    %615 = vmatpush1.msra.mxu0 %v461
    %616 = vmatprep.subr.mxu0 0.0
    %617 = vmatpush1.msra.mxu0 %v462
    %618 = vmatprep.subr.mxu0 0.0
    %619 = vmatpush1.msra.mxu0 %v463
    %620 = vmatprep.subr.mxu0 0.0
    %621 = vmatpush1.msra.mxu0 %v464
    %622 = vmatprep.subr.mxu0 0.0
    %623 = vmatpush1.msra.mxu0 %v465
    %624 = vmatprep.subr.mxu0 0.0
    %625 = vmatpush1.msra.mxu0 %v466
    %626 = vmatprep.subr.mxu0 0.0
    %627 = vmatpush1.msra.mxu0 %v467
    %628 = vmatprep.subr.mxu0 0.0
    %629 = vmatpush1.msra.mxu0 %v468
    %630 = vmatprep.subr.mxu0 0.0
    %631 = vmatpush1.msra.mxu0 %v469
    %632 = vmatprep.subr.mxu0 0.0
    %633 = vmatpush1.msra.mxu0 %v470
    %634 = vmatprep.subr.mxu0 0.0
    %635 = vmatpush1.msra.mxu0 %v471
    %636 = vmatprep.subr.mxu0 0.0
    %637 = vmatpush1.msra.mxu0 %v472
    %638 = vmatprep.subr.mxu0 0.0
    %639 = vmatpush1.msra.mxu0 %v473
    %640 = vmatprep.subr.mxu0 0.0
    %641 = vmatpush1.msra.mxu0 %v474
    %642 = vmatprep.mubr.f32.mxu0 %v436
    %643 = vmatmul.mubr.f32.gmra.mrb[0].mxu0 %v435
    %v644 = vpop.f32.mrb[0].mxu0
    %v645 = vadd.f32 %v576, %v644
    %v646 = vpop.f32.mrb[0].mxu0
    %647 = vdwg.mxu0
    %648 = vmatprep.subr.mxu0 0.0
    %649 = vmatpush1.msra.mxu0 %v475
    %650 = vmatprep.subr.mxu0 0.0
    %651 = vmatpush1.msra.mxu0 %v476
    %652 = vmatprep.subr.mxu0 0.0
    %653 = vmatpush1.msra.mxu0 %v477
    %654 = vmatprep.subr.mxu0 0.0
    %655 = vmatpush1.msra.mxu0 %v478
    %656 = vmatprep.subr.mxu0 0.0
    %657 = vmatpush1.msra.mxu0 %v479
    %658 = vmatprep.subr.mxu0 0.0
    %659 = vmatpush1.msra.mxu0 %v480
    %660 = vmatprep.subr.mxu0 0.0
    %661 = vmatpush1.msra.mxu0 %v481
    %662 = vmatprep.subr.mxu0 0.0
    %663 = vmatpush1.msra.mxu0 %v482
    %664 = vmatprep.subr.mxu0 0.0
    %665 = vmatpush1.msra.mxu0 %v483
    %666 = vmatprep.subr.mxu0 0.0
    %667 = vmatpush1.msra.mxu0 %v484
    %668 = vmatprep.subr.mxu0 0.0
    %669 = vmatpush1.msra.mxu0 %v485
    %670 = vmatprep.subr.mxu0 0.0
    %671 = vmatpush1.msra.mxu0 %v486
    %672 = vmatprep.subr.mxu0 0.0
    %673 = vmatpush1.msra.mxu0 %v487
    %674 = vmatprep.subr.mxu0 0.0
    %675 = vmatpush1.msra.mxu0 %v488
    %676 = vmatprep.subr.mxu0 0.0
    %677 = vmatpush1.msra.mxu0 %v489
    %678 = vmatprep.subr.mxu0 0.0
    %679 = vmatpush1.msra.mxu0 %v490
    %680 = vmatprep.subr.mxu0 0.0
    %681 = vmatpush1.msra.mxu0 %v491
    %682 = vmatprep.subr.mxu0 0.0
    %683 = vmatpush1.msra.mxu0 %v492
    %684 = vmatprep.subr.mxu0 0.0
    %685 = vmatpush1.msra.mxu0 %v493
    %686 = vmatprep.subr.mxu0 0.0
    %687 = vmatpush1.msra.mxu0 %v494
    %688 = vmatprep.subr.mxu0 0.0
    %689 = vmatpush1.msra.mxu0 %v495
    %690 = vmatprep.subr.mxu0 0.0
    %691 = vmatpush1.msra.mxu0 %v496
    %692 = vmatprep.subr.mxu0 0.0
    %693 = vmatpush1.msra.mxu0 %v497
    %694 = vmatprep.subr.mxu0 0.0
    %695 = vmatpush1.msra.mxu0 %v498
    %696 = vmatprep.subr.mxu0 0.0
    %697 = vmatpush1.msra.mxu0 %v499
    %698 = vmatprep.subr.mxu0 0.0
    %699 = vmatpush1.msra.mxu0 %v500
    %700 = vmatprep.subr.mxu0 0.0
    %701 = vmatpush1.msra.mxu0 %v501
    %702 = vmatprep.subr.mxu0 0.0
    %703 = vmatpush1.msra.mxu0 %v502
    %704 = vmatprep.subr.mxu0 0.0
    %705 = vmatpush1.msra.mxu0 %v503
    %706 = vmatprep.subr.mxu0 0.0
    %707 = vmatpush1.msra.mxu0 %v504
    %708 = vmatprep.subr.mxu0 0.0
    %709 = vmatpush1.msra.mxu0 %v505
    %710 = vmatprep.subr.mxu0 0.0
    %711 = vmatpush1.msra.mxu0 %v506
    %712 = vmatprep.mubr.f32.mxu0 %v438
    %713 = vmatmul.mubr.f32.gmra.mrb[0].mxu0 %v437
    %v714 = vpop.f32.mrb[0].mxu0
    %v715 = vadd.f32 %v645, %v714
    %v716 = vpop.f32.mrb[0].mxu0
    %717 = vdwg.mxu0
    %718 = vmatprep.subr.mxu0 0.0
    %719 = vmatpush1.msra.mxu0 %v507
    %720 = vmatprep.subr.mxu0 0.0
    %721 = vmatpush1.msra.mxu0 %v508
    %722 = vmatprep.subr.mxu0 0.0
    %723 = vmatpush1.msra.mxu0 %v509
    %724 = vmatprep.subr.mxu0 0.0
    %725 = vmatpush1.msra.mxu0 %v510
    %726 = vmatprep.subr.mxu0 0.0
    %727 = vmatpush1.msra.mxu0 %v511
    %728 = vmatprep.subr.mxu0 0.0
    %729 = vmatpush1.msra.mxu0 %v512
    %730 = vmatprep.subr.mxu0 0.0
    %731 = vmatpush1.msra.mxu0 %v513
    %732 = vmatprep.subr.mxu0 0.0
    %733 = vmatpush1.msra.mxu0 %v514
    %734 = vmatprep.subr.mxu0 0.0
    %735 = vmatpush1.msra.mxu0 %v515
    %736 = vmatprep.subr.mxu0 0.0
    %737 = vmatpush1.msra.mxu0 %v516
    %738 = vmatprep.subr.mxu0 0.0
    %739 = vmatpush1.msra.mxu0 %v517
    %740 = vmatprep.subr.mxu0 0.0
    %741 = vmatpush1.msra.mxu0 %v518
    %742 = vmatprep.subr.mxu0 0.0
    %743 = vmatpush1.msra.mxu0 %v519
    %744 = vmatprep.subr.mxu0 0.0
    %745 = vmatpush1.msra.mxu0 %v520
    %746 = vmatprep.subr.mxu0 0.0
    %747 = vmatpush1.msra.mxu0 %v521
    %748 = vmatprep.subr.mxu0 0.0
    %749 = vmatpush1.msra.mxu0 %v522
    %750 = vmatprep.subr.mxu0 0.0
    %751 = vmatpush1.msra.mxu0 %v523
    %752 = vmatprep.subr.mxu0 0.0
    %753 = vmatpush1.msra.mxu0 %v524
    %754 = vmatprep.subr.mxu0 0.0
    %755 = vmatpush1.msra.mxu0 %v525
    %756 = vmatprep.subr.mxu0 0.0
    %757 = vmatpush1.msra.mxu0 %v526
    %758 = vmatprep.subr.mxu0 0.0
    %759 = vmatpush1.msra.mxu0 %v527
    %760 = vmatprep.subr.mxu0 0.0
    %761 = vmatpush1.msra.mxu0 %v528
    %762 = vmatprep.subr.mxu0 0.0
    %763 = vmatpush1.msra.mxu0 %v529
    %764 = vmatprep.subr.mxu0 0.0
    %765 = vmatpush1.msra.mxu0 %v530
    %766 = vmatprep.subr.mxu0 0.0
    %767 = vmatpush1.msra.mxu0 %v531
    %768 = vmatprep.subr.mxu0 0.0
    %769 = vmatpush1.msra.mxu0 %v532
    %770 = vmatprep.subr.mxu0 0.0
    %771 = vmatpush1.msra.mxu0 %v533
    %772 = vmatprep.subr.mxu0 0.0
    %773 = vmatpush1.msra.mxu0 %v534
    %774 = vmatprep.subr.mxu0 0.0
    %775 = vmatpush1.msra.mxu0 %v535
    %776 = vmatprep.subr.mxu0 0.0
    %777 = vmatpush1.msra.mxu0 %v536
    %778 = vmatprep.subr.mxu0 0.0
    %779 = vmatpush1.msra.mxu0 %v537
    %780 = vmatprep.subr.mxu0 0.0
    %781 = vmatpush1.msra.mxu0 %v538
    %782 = vmatprep.mubr.f32.mxu0 %v440
    %783 = vmatmul.mubr.f32.gmra.mrb[0].mxu0 %v439
    %v784 = vpop.f32.mrb[0].mxu0
    %v785 = vadd.f32 %v715, %v784
    %v786 = vpop.f32.mrb[0].mxu0
    %787 = vdwg.mxu0
    %788 = vmatprep.subr.mxu0 0.0
    %789 = vmatpush1.msra.mxu0 %v539
    %790 = vmatprep.subr.mxu0 0.0
    %791 = vmatpush1.msra.mxu0 %v540
    %792 = vmatprep.subr.mxu0 0.0
    %793 = vmatpush1.msra.mxu0 %v541
    %794 = vmatprep.subr.mxu0 0.0
    %795 = vmatpush1.msra.mxu0 %v542
    %796 = vmatprep.subr.mxu0 0.0
    %797 = vmatpush1.msra.mxu0 %v543
    %798 = vmatprep.subr.mxu0 0.0
    %799 = vmatpush1.msra.mxu0 %v544
    %800 = vmatprep.subr.mxu0 0.0
    %801 = vmatpush1.msra.mxu0 %v545
    %802 = vmatprep.subr.mxu0 0.0
    %803 = vmatpush1.msra.mxu0 %v546
    %804 = vmatprep.subr.mxu0 0.0
    %805 = vmatpush1.msra.mxu0 %v547
    %806 = vmatprep.subr.mxu0 0.0
    %807 = vmatpush1.msra.mxu0 %v548
    %808 = vmatprep.subr.mxu0 0.0
    %809 = vmatpush1.msra.mxu0 %v549
    %810 = vmatprep.subr.mxu0 0.0
    %811 = vmatpush1.msra.mxu0 %v550
    %812 = vmatprep.subr.mxu0 0.0
    %813 = vmatpush1.msra.mxu0 %v551
    %814 = vmatprep.subr.mxu0 0.0
    %815 = vmatpush1.msra.mxu0 %v552
    %816 = vmatprep.subr.mxu0 0.0
    %817 = vmatpush1.msra.mxu0 %v553
    %818 = vmatprep.subr.mxu0 0.0
    %819 = vmatpush1.msra.mxu0 %v554
    %820 = vmatprep.subr.mxu0 0.0
    %821 = vmatpush1.msra.mxu0 %v555
    %822 = vmatprep.subr.mxu0 0.0
    %823 = vmatpush1.msra.mxu0 %v556
    %824 = vmatprep.subr.mxu0 0.0
    %825 = vmatpush1.msra.mxu0 %v557
    %826 = vmatprep.subr.mxu0 0.0
    %827 = vmatpush1.msra.mxu0 %v558
    %828 = vmatprep.subr.mxu0 0.0
    %829 = vmatpush1.msra.mxu0 %v559
    %830 = vmatprep.subr.mxu0 0.0
    %831 = vmatpush1.msra.mxu0 %v560
    %832 = vmatprep.subr.mxu0 0.0
    %833 = vmatpush1.msra.mxu0 %v561
    %834 = vmatprep.subr.mxu0 0.0
    %835 = vmatpush1.msra.mxu0 %v562
    %836 = vmatprep.subr.mxu0 0.0
    %837 = vmatpush1.msra.mxu0 %v563
    %838 = vmatprep.subr.mxu0 0.0
    %839 = vmatpush1.msra.mxu0 %v564
    %840 = vmatprep.subr.mxu0 0.0
    %841 = vmatpush1.msra.mxu0 %v565
    %842 = vmatprep.subr.mxu0 0.0
    %843 = vmatpush1.msra.mxu0 %v566
    %844 = vmatprep.subr.mxu0 0.0
    %845 = vmatpush1.msra.mxu0 %v567
    %846 = vmatprep.subr.mxu0 0.0
    %847 = vmatpush1.msra.mxu0 %v568
    %848 = vmatprep.subr.mxu0 0.0
    %849 = vmatpush1.msra.mxu0 %v569
    %850 = vmatprep.subr.mxu0 0.0
    %851 = vmatpush1.msra.mxu0 %v570
    %852 = vmatprep.mubr.f32.mxu0 %v442
    %853 = vmatmul.mubr.f32.gmra.mrb[0].mxu0 %v441
    %v854 = vpop.f32.mrb[0].mxu0
    %v855 = vadd.f32 %v785, %v854
    %v856 = vpop.f32.mrb[0].mxu0
    %857 = vdwg.mxu0
    %v858 = vlaneseq
    %v859 = vand.u32 %v858, 127
    %vm860 = vcmp.lt.s32.totalorder %v859, 4
    %v861 = vsel %vm860, %v855, 0.0
    %862 = vadd.xlane.f32.xlu0 %v861
    %v863 = vpop.xlane.xlu0 %862
    %vm864 = vcmp.eq.s32.totalorder %v859, 4
    %v865 = vsel %vm864, %v855, 0.0
    %866 = vadd.xlane.f32.xlu0 %v865
    %v867 = vpop.xlane.xlu0 %866
    %v868 = vmul.f32 %v863, 0.25
    %v869 = vadd.f32 %v867, %v855
    %v870 = vsub.f32 %v869, %v868
    %871 = vst [vmem:[#allocation10] sm:$0xff] %v870
    // Predicated region
    $region38: #{tpu_custom_call.1} parent=1 // pred_check
      _
    $region39: #{tpu_custom_call.1} parent=1 // pred_check_branch
      %873 = sbr.rel (0) target = $region41
    $region40: #{tpu_custom_call.1} parent=1 // pred_region
      %s875 = ssub.s32 128, 128
      %876 = vsyncadd [#allocation4], %s875
      %s878 = sshll.u32 [#allocation10], 4
      %s879 = int_to_ptr.vmem [resolvable:$true] %s878
      %881 = dma.vmem_to_hbm [thread:$0]  %s879, 128, %s5, [#allocation4]
    $region41: #{tpu_custom_call.1} parent=1 // pred_fallthru
      _
    // Predicated region
    $region42: #{tpu_custom_call.1} parent=1 // pred_check
      _
    $region43: #{tpu_custom_call.1} parent=1 // pred_check_branch
      %883 = sbr.rel (0) target = $region45
    $region44: #{tpu_custom_call.1} parent=1 // pred_region
      %884 = dma.done [#allocation4], 128
    $region45: #{tpu_custom_call.1} parent=1 // pred_fallthru
      _
    %885 = vsyncpa [#allocation3], 1
    %886 = vsyncpa [#allocation6], 1
    %887 = vsyncpa [#allocation9], 1
    %888 = vsyncpa [#allocation4], 1

</llo_original>
